<compile_context>
chip_gen: v5e
topology: v5e:2x2
jax: 0.10.0
libtpu: 0.0.40
codegen_flags: <defaults>
</compile_context>

<pallas_src>
import functools

import jax
import jax.numpy as jnp
from jax.experimental import pallas as pl
from jax.experimental.pallas import tpu as pltpu


def _vae_kernel(
    x_ref,        # [TB, IMG]   f32
    eps_ref,      # [TB, 2Z]    f32, noise in lanes [Z:], zeros in lanes [:Z]
    w1_ref,       # [IMG, H]    bf16
    b1_ref,       # [1, H]      f32
    w2_ref,       # [H, 2Z]     bf16
    b2_ref,       # [1, 2Z]     f32
    w3d_ref,      # [2Z, H]     bf16, rows [:Z] == rows [Z:] == w3 (duplicated)
    b3_ref,       # [1, H]      f32
    w4_ref,       # [H, IMG]    bf16
    b4_ref,       # [1, IMG]    f32
    xrec_ref,     # out: [TB, IMG]  f32
    muvar_ref,    # out: [TB, 2Z]   f32  (mu in lanes [:Z], log_var in lanes [Z:])
    *,
    z_dim: int,
):
    # ---- encoder: Linear -> ReLU -> Linear (bf16 operands, f32 accumulate) ----
    x = x_ref[...].astype(jnp.bfloat16)
    h1 = jnp.dot(x, w1_ref[...], preferred_element_type=jnp.float32) + b1_ref[...]
    h1 = jnp.maximum(h1, 0.0)
    pre_z = (
        jnp.dot(h1.astype(jnp.bfloat16), w2_ref[...], preferred_element_type=jnp.float32)
        + b2_ref[...]
    )  # [TB, 2Z]: lanes [:Z] = mu, lanes [Z:] = log_var

    # Lane-dense 128-wide store of the (mu, log_var) slab; sliced in the wrapper.
    muvar_ref[...] = pre_z.astype(muvar_ref.dtype)

    # ---- reparameterize on the full 128-lane slab (no cross-lane movement) ----
    # slab lanes [:Z]  = mu
    # slab lanes [Z:]  = exp(log_var/2) * eps        (eps_ref is zero in [:Z])
    # The decoder weight is duplicated row-wise, so
    #   slab @ w3d = mu @ w3 + (sigma*eps) @ w3 = (mu + sigma*eps) @ w3 = z @ w3.
    lane = jax.lax.broadcasted_iota(jnp.int32, pre_z.shape, dimension=1)
    sigma_eps = jnp.exp(pre_z * 0.5) * eps_ref[...]
    slab = jnp.where(lane < z_dim, pre_z, sigma_eps)

    # ---- decoder: Linear -> ReLU -> Linear -> sigmoid ----
    h2 = (
        jnp.dot(slab.astype(jnp.bfloat16), w3d_ref[...], preferred_element_type=jnp.float32)
        + b3_ref[...]
    )
    h2 = jnp.maximum(h2, 0.0)
    logits = (
        jnp.dot(h2.astype(jnp.bfloat16), w4_ref[...], preferred_element_type=jnp.float32)
        + b4_ref[...]
    )
    xrec_ref[...] = jax.nn.sigmoid(logits).astype(xrec_ref.dtype)


def vae_forward(x, eps, params, *, z_dim, batch_tile=256):
    """x: [B, IMG] f32, eps: [B, Z] f32.  Returns (x_reconst, mu, log_var)."""
    B, img = x.shape
    w1, b1, w2, b2, w3, b3, w4, b4 = params
    h_dim = w1.shape[1]
    two_z = 2 * z_dim

    # bf16 MXU operands (f32 accumulation requested inside the kernel).
    w1b = w1.astype(jnp.bfloat16)
    w2b = w2.astype(jnp.bfloat16)
    w4b = w4.astype(jnp.bfloat16)
    # Duplicate decoder input weight [Z, H] -> [2Z, H] so the latent contraction
    # consumes the full 128-lane (mu | sigma*eps) slab and the MXU performs the
    # mu + sigma*eps reduction itself.
    w3d = jnp.concatenate([w3, w3], axis=0).astype(jnp.bfloat16)
    # Pad eps [B, Z] -> [B, 2Z]; noise lands in the log_var-aligned lanes [Z:].
    eps_pad = jnp.zeros((B, two_z), jnp.float32).at[:, z_dim:].set(eps.astype(jnp.float32))

    # Batch tiling: biggest tile <= batch_tile that divides B.  Weights stay
    # VMEM-resident across grid steps (constant index_map).
    tb = min(batch_tile, B)
    assert B % tb == 0, "batch must be divisible by the batch tile"
    grid = (B // tb,)

    def row_spec(cols):
        return pl.BlockSpec((tb, cols), lambda i: (i, 0))

    def full_spec(rows, cols):
        return pl.BlockSpec((rows, cols), lambda i: (0, 0))

    kernel = functools.partial(_vae_kernel, z_dim=z_dim)

    flops = 2 * B * (img * h_dim + h_dim * two_z + two_z * h_dim + h_dim * img)
    transcendentals = B * (two_z + img)                      # exp + sigmoid
    bytes_accessed = (
        (x.size + eps_pad.size) * 4
        + (w1b.size + w2b.size + w3d.size + w4b.size) * 2
        + (b1.size + b2.size + b3.size + b4.size) * 4
        + (B * img + B * two_z) * 4
    )

    xrec, muvar = pl.pallas_call(
        kernel,
        out_shape=(
            jax.ShapeDtypeStruct((B, img), jnp.float32),     # x_reconst
            jax.ShapeDtypeStruct((B, two_z), jnp.float32),   # [mu | log_var] slab
        ),
        grid=grid,
        in_specs=[
            row_spec(img),               # x
            row_spec(two_z),             # eps (padded, aligned with log_var lanes)
            full_spec(img, h_dim),       # w1
            full_spec(1, h_dim),         # b1
            full_spec(h_dim, two_z),     # w2
            full_spec(1, two_z),         # b2
            full_spec(two_z, h_dim),     # w3 (row-duplicated)
            full_spec(1, h_dim),         # b3
            full_spec(h_dim, img),       # w4
            full_spec(1, img),           # b4
        ],
        out_specs=(row_spec(img), row_spec(two_z)),
        compiler_params=pltpu.CompilerParams(dimension_semantics=("parallel",)),
        cost_estimate=pl.CostEstimate(
            flops=flops, transcendentals=transcendentals, bytes_accessed=bytes_accessed
        ),
    )(x, eps_pad, w1b, b1, w2b, b2, w3d, b3, w4b, b4)

    mu = muvar[:, :z_dim]
    log_var = muvar[:, z_dim:]
    return xrec, mu, log_var


def init_params(key, img_size, h_dim, z_dim):
    """Deterministic parameter init (torch.nn.Linear-style uniform)."""
    def linear(k, fan_in, fan_out):
        k_w, k_b = jax.random.split(k)
        bound = 1.0 / (fan_in ** 0.5)
        w = jax.random.uniform(k_w, (fan_in, fan_out), jnp.float32, -bound, bound)
        b = jax.random.uniform(k_b, (1, fan_out), jnp.float32, -bound, bound)
        return w, b

    k1, k2, k3, k4 = jax.random.split(key, 4)
    w1, b1 = linear(k1, img_size, h_dim)        # enc[0]
    w2, b2 = linear(k2, h_dim, 2 * z_dim)       # enc[2]
    w3, b3 = linear(k3, z_dim, h_dim)           # dec[0]
    w4, b4 = linear(k4, h_dim, img_size)        # dec[2]
    return (w1, b1, w2, b2, w3, b3, w4, b4)


if __name__ == "__main__":
    # Small shapes consistent with the module's MLP-over-flattened-image forward.
    B = 8
    IMG = 256     # flattened 16x16 image
    H = 128
    Z = 64        # 2*Z == 128 -> lane-dense (mu, log_var) slab

    key = jax.random.PRNGKey(0)
    k_params, k_x, k_eps = jax.random.split(key, 3)

    params = init_params(k_params, IMG, H, Z)
    x = jax.random.uniform(k_x, (B, IMG), jnp.float32)    # "image" input, flattened
    # TODO(synk): torch.randn(...).cuda() inside reparameterize has no in-kernel
    # equivalent matching torch RNG; noise is drawn here and passed in as eps.
    eps = jax.random.normal(k_eps, (B, Z), jnp.float32)

    x_reconst, mu, log_var = vae_forward(x, eps, params, z_dim=Z)
    jax.block_until_ready((x_reconst, mu, log_var))

    assert x_reconst.shape == (B, IMG)
    assert mu.shape == (B, Z)
    assert log_var.shape == (B, Z)

    # Pure-JAX reference mirroring the PyTorch forward at bf16-operand /
    # f32-accumulate precision.
    w1, b1, w2, b2, w3, b3, w4, b4 = params
    bf = jnp.bfloat16
    h1 = jnp.maximum(
        jnp.dot(x.astype(bf), w1.astype(bf), preferred_element_type=jnp.float32) + b1, 0.0)
    pre_z = jnp.dot(h1.astype(bf), w2.astype(bf), preferred_element_type=jnp.float32) + b2
    mu_ref, lv_ref = pre_z[:, :Z], pre_z[:, Z:]
    z = mu_ref + jnp.exp(lv_ref * 0.5) * eps
    h2 = jnp.maximum(
        jnp.dot(z.astype(bf), w3.astype(bf), preferred_element_type=jnp.float32) + b3, 0.0)
    xr_ref = jax.nn.sigmoid(
        jnp.dot(h2.astype(bf), w4.astype(bf), preferred_element_type=jnp.float32) + b4)

    # Kernel rounds mu and sigma*eps to bf16 separately (MXU does the sum), the
    # reference rounds their f32 sum once -> tolerate a small bf16-level delta.
    assert jnp.allclose(mu, mu_ref, atol=2e-3, rtol=2e-3)
    assert jnp.allclose(log_var, lv_ref, atol=2e-3, rtol=2e-3)
    assert jnp.allclose(x_reconst, xr_ref, atol=5e-3, rtol=5e-3)

    print("KERNEL_OK")
</pallas_src>

<mosaic_0001>
module attributes {stable_mosaic.version = 11 : i64} {
  func.func @_vae_kernel(%arg0: i32, %arg1: memref<8x256xf32, #tpu.memory_space<vmem>>, %arg2: memref<8x128xf32, #tpu.memory_space<vmem>>, %arg3: memref<256x128xbf16, #tpu.memory_space<vmem>>, %arg4: memref<1x128xf32, #tpu.memory_space<vmem>>, %arg5: memref<128x128xbf16, #tpu.memory_space<vmem>>, %arg6: memref<1x128xf32, #tpu.memory_space<vmem>>, %arg7: memref<128x128xbf16, #tpu.memory_space<vmem>>, %arg8: memref<1x128xf32, #tpu.memory_space<vmem>>, %arg9: memref<128x256xbf16, #tpu.memory_space<vmem>>, %arg10: memref<1x256xf32, #tpu.memory_space<vmem>>, %arg11: memref<8x256xf32, #tpu.memory_space<vmem>>, %arg12: memref<8x128xf32, #tpu.memory_space<vmem>>) attributes {dimension_semantics = [#tpu.dimension_semantics<parallel>], iteration_bounds = array<i64: 1>, scalar_prefetch = 0 : i64, scratch_operands = 0 : i64, tpu.core_type = #tpu.core_type<tc>, window_params = [{transform_indices = @transform_0, window_bounds = array<i64: 8, 256>}, {transform_indices = @transform_1, window_bounds = array<i64: 8, 128>}, {pipeline_mode = #tpu.pipeline_mode<synchronous>, transform_indices = @transform_2, window_bounds = array<i64: 256, 128>}, {pipeline_mode = #tpu.pipeline_mode<synchronous>, transform_indices = @transform_3, window_bounds = array<i64: 1, 128>}, {pipeline_mode = #tpu.pipeline_mode<synchronous>, transform_indices = @transform_4, window_bounds = array<i64: 128, 128>}, {pipeline_mode = #tpu.pipeline_mode<synchronous>, transform_indices = @transform_5, window_bounds = array<i64: 1, 128>}, {pipeline_mode = #tpu.pipeline_mode<synchronous>, transform_indices = @transform_6, window_bounds = array<i64: 128, 128>}, {pipeline_mode = #tpu.pipeline_mode<synchronous>, transform_indices = @transform_7, window_bounds = array<i64: 1, 128>}, {pipeline_mode = #tpu.pipeline_mode<synchronous>, transform_indices = @transform_8, window_bounds = array<i64: 128, 256>}, {pipeline_mode = #tpu.pipeline_mode<synchronous>, transform_indices = @transform_9, window_bounds = array<i64: 1, 256>}, {transform_indices = @transform_10, window_bounds = array<i64: 8, 256>}, {transform_indices = @transform_11, window_bounds = array<i64: 8, 128>}]} {
    %c0 = arith.constant 0 : index
    %c0_0 = arith.constant 0 : index
    %0 = vector.load %arg1[%c0, %c0_0] : memref<8x256xf32, #tpu.memory_space<vmem>>, vector<8x256xf32>
    %1 = arith.truncf %0 : vector<8x256xf32> to vector<8x256xbf16>
    %c0_1 = arith.constant 0 : index
    %c0_2 = arith.constant 0 : index
    %2 = vector.load %arg3[%c0_1, %c0_2] : memref<256x128xbf16, #tpu.memory_space<vmem>>, vector<256x128xbf16>
    %cst = arith.constant dense<0.000000e+00> : vector<8x128xf32>
    %3 = tpu.matmul %1, %2, %cst {dimension_numbers = #tpu.dot_dimension_numbers<[1], [0], [0], [1], [0, 0, 1, 1], [], []>} : vector<8x256xbf16>, vector<256x128xbf16>, vector<8x128xf32> -> vector<8x128xf32>
    %c0_3 = arith.constant 0 : index
    %c0_4 = arith.constant 0 : index
    %4 = vector.load %arg4[%c0_3, %c0_4] : memref<1x128xf32, #tpu.memory_space<vmem>>, vector<1x128xf32>
    %5 = vector.broadcast %4 : vector<1x128xf32> to vector<8x128xf32>
    %6 = arith.addf %3, %5 : vector<8x128xf32>
    %cst_5 = arith.constant 0.000000e+00 : f32
    %7 = vector.broadcast %cst_5 : f32 to vector<8x128xf32>
    %8 = arith.maximumf %6, %7 : vector<8x128xf32>
    %9 = arith.truncf %8 : vector<8x128xf32> to vector<8x128xbf16>
    %c0_6 = arith.constant 0 : index
    %c0_7 = arith.constant 0 : index
    %10 = vector.load %arg5[%c0_6, %c0_7] : memref<128x128xbf16, #tpu.memory_space<vmem>>, vector<128x128xbf16>
    %cst_8 = arith.constant dense<0.000000e+00> : vector<8x128xf32>
    %11 = tpu.matmul %9, %10, %cst_8 {dimension_numbers = #tpu.dot_dimension_numbers<[1], [0], [0], [1], [0, 0, 1, 1], [], []>} : vector<8x128xbf16>, vector<128x128xbf16>, vector<8x128xf32> -> vector<8x128xf32>
    %c0_9 = arith.constant 0 : index
    %c0_10 = arith.constant 0 : index
    %12 = vector.load %arg6[%c0_9, %c0_10] : memref<1x128xf32, #tpu.memory_space<vmem>>, vector<1x128xf32>
    %13 = vector.broadcast %12 : vector<1x128xf32> to vector<8x128xf32>
    %14 = arith.addf %11, %13 : vector<8x128xf32>
    %c0_11 = arith.constant 0 : index
    %c0_12 = arith.constant 0 : index
    %15 = vector.load %arg12[%c0_11, %c0_12] : memref<8x128xf32, #tpu.memory_space<vmem>>, vector<8x128xf32>
    tpu.vector_store %arg12[%c0_11, %c0_12], %14 {strides = array<i32>} : memref<8x128xf32, #tpu.memory_space<vmem>>, vector<8x128xf32>,
    %16 = tpu.iota {dimensions = array<i32: 1>} : vector<8x128xi32>
    %cst_13 = arith.constant 5.000000e-01 : f32
    %17 = vector.broadcast %cst_13 : f32 to vector<8x128xf32>
    %18 = arith.mulf %14, %17 : vector<8x128xf32>
    %19 = math.exp %18 : vector<8x128xf32>
    %c0_14 = arith.constant 0 : index
    %c0_15 = arith.constant 0 : index
    %20 = vector.load %arg2[%c0_14, %c0_15] : memref<8x128xf32, #tpu.memory_space<vmem>>, vector<8x128xf32>
    %21 = arith.mulf %19, %20 : vector<8x128xf32>
    %c64_i32 = arith.constant 64 : i32
    %22 = vector.broadcast %c64_i32 : i32 to vector<8x128xi32>
    %23 = arith.cmpi slt, %16, %22 : vector<8x128xi32>
    %24 = arith.select %23, %14, %21 : vector<8x128xi1>, vector<8x128xf32>
    %25 = arith.truncf %24 : vector<8x128xf32> to vector<8x128xbf16>
    %c0_16 = arith.constant 0 : index
    %c0_17 = arith.constant 0 : index
    %26 = vector.load %arg7[%c0_16, %c0_17] : memref<128x128xbf16, #tpu.memory_space<vmem>>, vector<128x128xbf16>
    %cst_18 = arith.constant dense<0.000000e+00> : vector<8x128xf32>
    %27 = tpu.matmul %25, %26, %cst_18 {dimension_numbers = #tpu.dot_dimension_numbers<[1], [0], [0], [1], [0, 0, 1, 1], [], []>} : vector<8x128xbf16>, vector<128x128xbf16>, vector<8x128xf32> -> vector<8x128xf32>
    %c0_19 = arith.constant 0 : index
    %c0_20 = arith.constant 0 : index
    %28 = vector.load %arg8[%c0_19, %c0_20] : memref<1x128xf32, #tpu.memory_space<vmem>>, vector<1x128xf32>
    %29 = vector.broadcast %28 : vector<1x128xf32> to vector<8x128xf32>
    %30 = arith.addf %27, %29 : vector<8x128xf32>
    %cst_21 = arith.constant 0.000000e+00 : f32
    %31 = vector.broadcast %cst_21 : f32 to vector<8x128xf32>
    %32 = arith.maximumf %30, %31 : vector<8x128xf32>
    %33 = arith.truncf %32 : vector<8x128xf32> to vector<8x128xbf16>
    %c0_22 = arith.constant 0 : index
    %c0_23 = arith.constant 0 : index
    %34 = vector.load %arg9[%c0_22, %c0_23] : memref<128x256xbf16, #tpu.memory_space<vmem>>, vector<128x256xbf16>
    %cst_24 = arith.constant dense<0.000000e+00> : vector<8x256xf32>
    %35 = tpu.matmul %33, %34, %cst_24 {dimension_numbers = #tpu.dot_dimension_numbers<[1], [0], [0], [1], [0, 0, 1, 1], [], []>} : vector<8x128xbf16>, vector<128x256xbf16>, vector<8x256xf32> -> vector<8x256xf32>
    %c0_25 = arith.constant 0 : index
    %c0_26 = arith.constant 0 : index
    %36 = vector.load %arg10[%c0_25, %c0_26] : memref<1x256xf32, #tpu.memory_space<vmem>>, vector<1x256xf32>
    %37 = vector.broadcast %36 : vector<1x256xf32> to vector<8x256xf32>
    %38 = arith.addf %35, %37 : vector<8x256xf32>
    %39 = arith.negf %38 : vector<8x256xf32>
    %40 = math.exp %39 : vector<8x256xf32>
    %cst_27 = arith.constant 1.000000e+00 : f32
    %41 = vector.broadcast %cst_27 : f32 to vector<8x256xf32>
    %42 = arith.addf %41, %40 : vector<8x256xf32>
    %43 = arith.divf %41, %42 : vector<8x256xf32>
    %c0_28 = arith.constant 0 : index
    %c0_29 = arith.constant 0 : index
    %44 = vector.load %arg11[%c0_28, %c0_29] : memref<8x256xf32, #tpu.memory_space<vmem>>, vector<8x256xf32>
    tpu.vector_store %arg11[%c0_28, %c0_29], %43 {strides = array<i32>} : memref<8x256xf32, #tpu.memory_space<vmem>>, vector<8x256xf32>,
    return
  }
  func.func @transform_0(%arg0: i32) -> (i32, i32) {
    %c0_i32 = arith.constant 0 : i32
    %c0_i32_0 = arith.constant 0 : i32
    return %arg0, %c0_i32 : i32, i32
  }
  func.func @transform_1(%arg0: i32) -> (i32, i32) {
    %c0_i32 = arith.constant 0 : i32
    %c0_i32_0 = arith.constant 0 : i32
    return %arg0, %c0_i32 : i32, i32
  }
  func.func @transform_2(%arg0: i32) -> (i32, i32) {
    %c0_i32 = arith.constant 0 : i32
    %c0_i32_0 = arith.constant 0 : i32
    %c0_i32_1 = arith.constant 0 : i32
    return %c0_i32, %c0_i32_0 : i32, i32
  }
  func.func @transform_3(%arg0: i32) -> (i32, i32) {
    %c0_i32 = arith.constant 0 : i32
    %c0_i32_0 = arith.constant 0 : i32
    %c0_i32_1 = arith.constant 0 : i32
    return %c0_i32, %c0_i32_0 : i32, i32
  }
  func.func @transform_4(%arg0: i32) -> (i32, i32) {
    %c0_i32 = arith.constant 0 : i32
    %c0_i32_0 = arith.constant 0 : i32
    %c0_i32_1 = arith.constant 0 : i32
    return %c0_i32, %c0_i32_0 : i32, i32
  }
  func.func @transform_5(%arg0: i32) -> (i32, i32) {
    %c0_i32 = arith.constant 0 : i32
    %c0_i32_0 = arith.constant 0 : i32
    %c0_i32_1 = arith.constant 0 : i32
    return %c0_i32, %c0_i32_0 : i32, i32
  }
  func.func @transform_6(%arg0: i32) -> (i32, i32) {
    %c0_i32 = arith.constant 0 : i32
    %c0_i32_0 = arith.constant 0 : i32
    %c0_i32_1 = arith.constant 0 : i32
    return %c0_i32, %c0_i32_0 : i32, i32
  }
  func.func @transform_7(%arg0: i32) -> (i32, i32) {
    %c0_i32 = arith.constant 0 : i32
    %c0_i32_0 = arith.constant 0 : i32
    %c0_i32_1 = arith.constant 0 : i32
    return %c0_i32, %c0_i32_0 : i32, i32
  }
  func.func @transform_8(%arg0: i32) -> (i32, i32) {
    %c0_i32 = arith.constant 0 : i32
    %c0_i32_0 = arith.constant 0 : i32
    %c0_i32_1 = arith.constant 0 : i32
    return %c0_i32, %c0_i32_0 : i32, i32
  }
  func.func @transform_9(%arg0: i32) -> (i32, i32) {
    %c0_i32 = arith.constant 0 : i32
    %c0_i32_0 = arith.constant 0 : i32
    %c0_i32_1 = arith.constant 0 : i32
    return %c0_i32, %c0_i32_0 : i32, i32
  }
  func.func @transform_10(%arg0: i32) -> (i32, i32) {
    %c0_i32 = arith.constant 0 : i32
    %c0_i32_0 = arith.constant 0 : i32
    return %arg0, %c0_i32 : i32, i32
  }
  func.func @transform_11(%arg0: i32) -> (i32, i32) {
    %c0_i32 = arith.constant 0 : i32
    %c0_i32_0 = arith.constant 0 : i32
    return %arg0, %c0_i32 : i32, i32
  }
}

</mosaic_0001>

<llo_original>
// kernel: tpu_custom_call.1
$region0: #{tpu_custom_call.1}
  #allocation0 [shape = 'u32[]', space=smem, size = 0x4, offset = 0x4, fixed_abs, tag = 'smem constant byte address 0x4 - core index']
  #allocation1 [shape = 'u32[72,128]{1,0:T(1,128)}', space=vmem, size = 0x9000, scoped, tag = 'internal scratch']
  %s0 = inlined_call_operand.hbm [shape: f32[8,256], index: 0, kind: input, shape index: {}]
  %s1 = inlined_call_operand.hbm [shape: f32[8,128], index: 1, kind: input, shape index: {}]
  %s2 = inlined_call_operand.hbm [shape: bf16[256,128], index: 2, kind: input, shape index: {}]
  %s3 = inlined_call_operand.vmem [shape: f32[1,128], index: 3, kind: input, shape index: {}]
  %s4 = inlined_call_operand.hbm [shape: bf16[128,128], index: 4, kind: input, shape index: {}]
  %s5 = inlined_call_operand.vmem [shape: f32[1,128], index: 5, kind: input, shape index: {}]
  %s6 = inlined_call_operand.hbm [shape: bf16[128,128], index: 6, kind: input, shape index: {}]
  %s7 = inlined_call_operand.vmem [shape: f32[1,128], index: 7, kind: input, shape index: {}]
  %s8 = inlined_call_operand.hbm [shape: bf16[128,256], index: 8, kind: input, shape index: {}]
  %s9 = inlined_call_operand.vmem [shape: f32[1,256], index: 9, kind: input, shape index: {}]
  %s10 = inlined_call_operand.hbm [shape: f32[8,256], index: 10, kind: output, shape index: {0}]
  %s11 = inlined_call_operand.hbm [shape: f32[8,128], index: 11, kind: output, shape index: {1}]
  %12 = xla_tuple %s10, %s11
  %s13 = sld [smem:[#allocation0]]
  $region82: #{tpu_custom_call.1} parent=0
    _
  %s15 = ssub.s32 1, %s13
  %s16 = scalar_select 0, %s15, %s13
  $region1: #{tpu_custom_call.1} parent=0
    #allocation2 [shape = 'u8[8192]{0}', space=vmem, size = 0x2000, scoped, tag = 'input window, operand 0, single buffered']
    #allocation3 [shape = 's32[1]{0}', space=sflag, size = 0x4, scoped, tag = 'scoped memory for tpu_custom_call.1']
    #allocation4 [shape = 's32[1]{0}', space=sflag, size = 0x4, scoped, tag = 'scoped memory for tpu_custom_call.1']
    #allocation5 [shape = 'u8[4096]{0}', space=vmem, size = 0x1000, scoped, tag = 'input window, operand 1, single buffered']
    #allocation6 [shape = 's32[1]{0}', space=sflag, size = 0x4, scoped, tag = 'scoped memory for tpu_custom_call.1']
    #allocation7 [shape = 'u8[65536]{0}', space=vmem, size = 0x10000, scoped, tag = 'input window, operand 2, single buffered']
    #allocation8 [shape = 'u8[32768]{0}', space=vmem, size = 0x8000, scoped, tag = 'input window, operand 4, single buffered']
    #allocation9 [shape = 's32[1]{0}', space=sflag, size = 0x4, scoped, tag = 'scoped memory for tpu_custom_call.1']
    #allocation10 [shape = 'u8[32768]{0}', space=vmem, size = 0x8000, scoped, tag = 'input window, operand 6, single buffered']
    #allocation11 [shape = 'u8[65536]{0}', space=vmem, size = 0x10000, scoped, tag = 'input window, operand 8, single buffered']
    #allocation12 [shape = 's32[1]{0}', space=sflag, size = 0x4, scoped, tag = 'scoped memory for tpu_custom_call.1']
    #allocation13 [shape = 'u8[8192]{0}', space=vmem, size = 0x2000, scoped, tag = 'output window, operand 0, single buffered']
    #allocation14 [shape = 'u8[4096]{0}', space=vmem, size = 0x1000, scoped, tag = 'output window, operand 1, single buffered']
    #allocation15 [shape = 's32[1]{0}', space=sflag, size = 0x4, scoped, tag = 'scoped memory for tpu_custom_call.1']
    %17 = vsyncpa [#allocation3], 0
    %18 = vsyncpa [#allocation6], 0
    %19 = vsyncpa [#allocation9], 0
    %20 = vsyncpa [#allocation12], 0
    %21 = vsyncpa [#allocation4], 0
    %22 = vsyncpa [#allocation15], 0
    // Predicated region
    $region2: #{tpu_custom_call.1} parent=1 // pred_check
      _
    $region3: #{tpu_custom_call.1} parent=1 // pred_check_branch
      %24 = sbr.rel (0) target = $region5
    $region4: #{tpu_custom_call.1} parent=1 // pred_region
      %26 = vsyncadd [#allocation3], 0
      %s28 = sshll.u32 %s0, 4
      %s29 = int_to_ptr.hbm [resolvable:$true] %s28
      %s30 = sshll.u32 [#allocation2], 4
      %s31 = int_to_ptr.vmem [resolvable:$true] %s30
      %33 = dma.hbm_to_vmem [thread:$0]  %s29, 256, %s31, [#allocation3]
    $region5: #{tpu_custom_call.1} parent=1 // pred_fallthru
      _
    // Predicated region
    $region6: #{tpu_custom_call.1} parent=1 // pred_check
      _
    $region7: #{tpu_custom_call.1} parent=1 // pred_check_branch
      %35 = sbr.rel (0) target = $region9
    $region8: #{tpu_custom_call.1} parent=1 // pred_region
      %37 = vsyncadd [#allocation6], 0
      %s39 = sshll.u32 %s1, 4
      %s40 = int_to_ptr.hbm [resolvable:$true] %s39
      %s41 = sshll.u32 [#allocation5], 4
      %s42 = int_to_ptr.vmem [resolvable:$true] %s41
      %44 = dma.hbm_to_vmem [thread:$0]  %s40, 128, %s42, [#allocation6]
    $region9: #{tpu_custom_call.1} parent=1 // pred_fallthru
      _
    // Predicated region
    $region10: #{tpu_custom_call.1} parent=1 // pred_check
      _
    $region11: #{tpu_custom_call.1} parent=1 // pred_check_branch
      %46 = sbr.rel (0) target = $region13
    $region12: #{tpu_custom_call.1} parent=1 // pred_region
      %48 = vsyncadd [#allocation6], 0
      %s49 = sshll.u32 %s2, 4
      %s50 = int_to_ptr.hbm [resolvable:$true] %s49
      %s51 = sshll.u32 [#allocation7], 4
      %s52 = int_to_ptr.vmem [resolvable:$true] %s51
      %57 = dma.hbm_to_vmem [thread:$0]  %s50, 2048, %s52, [#allocation6], 64, 64, 4
    $region13: #{tpu_custom_call.1} parent=1 // pred_fallthru
      _
    // Predicated region
    $region14: #{tpu_custom_call.1} parent=1 // pred_check
      _
    $region15: #{tpu_custom_call.1} parent=1 // pred_check_branch
      %59 = sbr.rel (0) target = $region17
    $region16: #{tpu_custom_call.1} parent=1 // pred_region
      _
    $region17: #{tpu_custom_call.1} parent=1 // pred_fallthru
      _
    // Predicated region
    $region18: #{tpu_custom_call.1} parent=1 // pred_check
      _
    $region19: #{tpu_custom_call.1} parent=1 // pred_check_branch
      %61 = sbr.rel (0) target = $region21
    $region20: #{tpu_custom_call.1} parent=1 // pred_region
      %63 = vsyncadd [#allocation9], 0
      %s64 = sshll.u32 %s4, 4
      %s65 = int_to_ptr.hbm [resolvable:$true] %s64
      %s66 = sshll.u32 [#allocation8], 4
      %s67 = int_to_ptr.vmem [resolvable:$true] %s66
      %72 = dma.hbm_to_vmem [thread:$0]  %s65, 1024, %s67, [#allocation9], 64, 64, 4
    $region21: #{tpu_custom_call.1} parent=1 // pred_fallthru
      _
    // Predicated region
    $region22: #{tpu_custom_call.1} parent=1 // pred_check
      _
    $region23: #{tpu_custom_call.1} parent=1 // pred_check_branch
      %74 = sbr.rel (0) target = $region25
    $region24: #{tpu_custom_call.1} parent=1 // pred_region
      _
    $region25: #{tpu_custom_call.1} parent=1 // pred_fallthru
      _
    // Predicated region
    $region26: #{tpu_custom_call.1} parent=1 // pred_check
      _
    $region27: #{tpu_custom_call.1} parent=1 // pred_check_branch
      %76 = sbr.rel (0) target = $region29
    $region28: #{tpu_custom_call.1} parent=1 // pred_region
      %78 = vsyncadd [#allocation9], 0
      %s79 = sshll.u32 %s6, 4
      %s80 = int_to_ptr.hbm [resolvable:$true] %s79
      %s81 = sshll.u32 [#allocation10], 4
      %s82 = int_to_ptr.vmem [resolvable:$true] %s81
      %87 = dma.hbm_to_vmem [thread:$0]  %s80, 1024, %s82, [#allocation9], 64, 64, 4
    $region29: #{tpu_custom_call.1} parent=1 // pred_fallthru
      _
    // Predicated region
    $region30: #{tpu_custom_call.1} parent=1 // pred_check
      _
    $region31: #{tpu_custom_call.1} parent=1 // pred_check_branch
      %89 = sbr.rel (0) target = $region33
    $region32: #{tpu_custom_call.1} parent=1 // pred_region
      _
    $region33: #{tpu_custom_call.1} parent=1 // pred_fallthru
      _
    // Predicated region
    $region34: #{tpu_custom_call.1} parent=1 // pred_check
      _
    $region35: #{tpu_custom_call.1} parent=1 // pred_check_branch
      %91 = sbr.rel (0) target = $region37
    $region36: #{tpu_custom_call.1} parent=1 // pred_region
      %93 = vsyncadd [#allocation12], 0
      %s94 = sshll.u32 %s8, 4
      %s95 = int_to_ptr.hbm [resolvable:$true] %s94
      %s96 = sshll.u32 [#allocation11], 4
      %s97 = int_to_ptr.vmem [resolvable:$true] %s96
      %102 = dma.hbm_to_vmem [thread:$0]  %s95, 2048, %s97, [#allocation12], 128, 128, 8
    $region37: #{tpu_custom_call.1} parent=1 // pred_fallthru
      _
    // Predicated region
    $region38: #{tpu_custom_call.1} parent=1 // pred_check
      _
    $region39: #{tpu_custom_call.1} parent=1 // pred_check_branch
      %104 = sbr.rel (0) target = $region41
    $region40: #{tpu_custom_call.1} parent=1 // pred_region
      _
    $region41: #{tpu_custom_call.1} parent=1 // pred_fallthru
      _
    // Predicated region
    $region42: #{tpu_custom_call.1} parent=1 // pred_check
      _
    $region43: #{tpu_custom_call.1} parent=1 // pred_check_branch
      %106 = sbr.rel (0) target = $region45
    $region44: #{tpu_custom_call.1} parent=1 // pred_region
      %108 = dma.done [#allocation3], 256
    $region45: #{tpu_custom_call.1} parent=1 // pred_fallthru
      _
    // Predicated region
    $region46: #{tpu_custom_call.1} parent=1 // pred_check
      _
    $region47: #{tpu_custom_call.1} parent=1 // pred_check_branch
      %110 = sbr.rel (0) target = $region49
    $region48: #{tpu_custom_call.1} parent=1 // pred_region
      %112 = dma.done [#allocation6], 128
    $region49: #{tpu_custom_call.1} parent=1 // pred_fallthru
      _
    // Predicated region
    $region50: #{tpu_custom_call.1} parent=1 // pred_check
      _
    $region51: #{tpu_custom_call.1} parent=1 // pred_check_branch
      %114 = sbr.rel (0) target = $region53
    $region52: #{tpu_custom_call.1} parent=1 // pred_region
      %116 = dma.done [#allocation6], 2048
    $region53: #{tpu_custom_call.1} parent=1 // pred_fallthru
      _
    // Predicated region
    $region54: #{tpu_custom_call.1} parent=1 // pred_check
      _
    $region55: #{tpu_custom_call.1} parent=1 // pred_check_branch
      %118 = sbr.rel (0) target = $region57
    $region56: #{tpu_custom_call.1} parent=1 // pred_region
      %120 = dma.done [#allocation9], 1024
    $region57: #{tpu_custom_call.1} parent=1 // pred_fallthru
      _
    // Predicated region
    $region58: #{tpu_custom_call.1} parent=1 // pred_check
      _
    $region59: #{tpu_custom_call.1} parent=1 // pred_check_branch
      %122 = sbr.rel (0) target = $region61
    $region60: #{tpu_custom_call.1} parent=1 // pred_region
      %124 = dma.done [#allocation9], 1024
    $region61: #{tpu_custom_call.1} parent=1 // pred_fallthru
      _
    // Predicated region
    $region62: #{tpu_custom_call.1} parent=1 // pred_check
      _
    $region63: #{tpu_custom_call.1} parent=1 // pred_check_branch
      %126 = sbr.rel (0) target = $region65
    $region64: #{tpu_custom_call.1} parent=1 // pred_region
      %128 = dma.done [#allocation12], 2048
    $region65: #{tpu_custom_call.1} parent=1 // pred_fallthru
      _
    %v129 = vld [vmem:[#allocation2] sm:$0xff]
    %v130 = vld [vmem:[#allocation2 + $0x8] sm:$0xff]
    %v131 = vpack.c.bf16 %v129, %v129
    %v132 = vpack.c.bf16 %v130, %v130
    %v133 = vld [vmem:[#allocation7] sm:$0xf]
    %v134 = vld [vmem:[#allocation7 + $0x4] sm:$0xf]
    %v135 = vld [vmem:[#allocation7 + $0x8] sm:$0xf]
    %v136 = vld [vmem:[#allocation7 + $0xc] sm:$0xf]
    %v137 = vld [vmem:[#allocation7 + $0x10] sm:$0xf]
    %v138 = vld [vmem:[#allocation7 + $0x14] sm:$0xf]
    %v139 = vld [vmem:[#allocation7 + $0x18] sm:$0xf]
    %v140 = vld [vmem:[#allocation7 + $0x1c] sm:$0xf]
    %v141 = vld [vmem:[#allocation7 + $0x20] sm:$0xf]
    %v142 = vld [vmem:[#allocation7 + $0x24] sm:$0xf]
    %v143 = vld [vmem:[#allocation7 + $0x28] sm:$0xf]
    %v144 = vld [vmem:[#allocation7 + $0x2c] sm:$0xf]
    %v145 = vld [vmem:[#allocation7 + $0x30] sm:$0xf]
    %v146 = vld [vmem:[#allocation7 + $0x34] sm:$0xf]
    %v147 = vld [vmem:[#allocation7 + $0x38] sm:$0xf]
    %v148 = vld [vmem:[#allocation7 + $0x3c] sm:$0xf]
    %v149 = vld [vmem:[#allocation7 + $0x40] sm:$0xf]
    %v150 = vld [vmem:[#allocation7 + $0x44] sm:$0xf]
    %v151 = vld [vmem:[#allocation7 + $0x48] sm:$0xf]
    %v152 = vld [vmem:[#allocation7 + $0x4c] sm:$0xf]
    %v153 = vld [vmem:[#allocation7 + $0x50] sm:$0xf]
    %v154 = vld [vmem:[#allocation7 + $0x54] sm:$0xf]
    %v155 = vld [vmem:[#allocation7 + $0x58] sm:$0xf]
    %v156 = vld [vmem:[#allocation7 + $0x5c] sm:$0xf]
    %v157 = vld [vmem:[#allocation7 + $0x60] sm:$0xf]
    %v158 = vld [vmem:[#allocation7 + $0x64] sm:$0xf]
    %v159 = vld [vmem:[#allocation7 + $0x68] sm:$0xf]
    %v160 = vld [vmem:[#allocation7 + $0x6c] sm:$0xf]
    %v161 = vld [vmem:[#allocation7 + $0x70] sm:$0xf]
    %v162 = vld [vmem:[#allocation7 + $0x74] sm:$0xf]
    %v163 = vld [vmem:[#allocation7 + $0x78] sm:$0xf]
    %v164 = vld [vmem:[#allocation7 + $0x7c] sm:$0xf]
    %v165 = vld [vmem:[%s3] sm:$0x1]
    %v167 = vperm.slane %v165, 0
    %v201 = vunpack.c.l.b16 %v133
    %v202 = vunpack.c.l.b16 %v134
    %v203 = vunpack.c.l.b16 %v135
    %v204 = vunpack.c.l.b16 %v136
    %v205 = vunpack.c.l.b16 %v137
    %v206 = vunpack.c.l.b16 %v138
    %v207 = vunpack.c.l.b16 %v139
    %v208 = vunpack.c.l.b16 %v140
    %v209 = vunpack.c.l.b16 %v141
    %v210 = vunpack.c.l.b16 %v142
    %v211 = vunpack.c.l.b16 %v143
    %v212 = vunpack.c.l.b16 %v144
    %v213 = vunpack.c.l.b16 %v145
    %v214 = vunpack.c.l.b16 %v146
    %v215 = vunpack.c.l.b16 %v147
    %v216 = vunpack.c.l.b16 %v148
    %v217 = vunpack.c.l.b16 %v149
    %v218 = vunpack.c.l.b16 %v150
    %v219 = vunpack.c.l.b16 %v151
    %v220 = vunpack.c.l.b16 %v152
    %v221 = vunpack.c.l.b16 %v153
    %v222 = vunpack.c.l.b16 %v154
    %v223 = vunpack.c.l.b16 %v155
    %v224 = vunpack.c.l.b16 %v156
    %v225 = vunpack.c.l.b16 %v157
    %v226 = vunpack.c.l.b16 %v158
    %v227 = vunpack.c.l.b16 %v159
    %v228 = vunpack.c.l.b16 %v160
    %v229 = vunpack.c.l.b16 %v161
    %v230 = vunpack.c.l.b16 %v162
    %v231 = vunpack.c.l.b16 %v163
    %v232 = vunpack.c.l.b16 %v164
    %v233 = vpack.c.b16 %v202, %v201
    %v234 = vpack.c.b16 %v204, %v203
    %v235 = vpack.c.b16 %v206, %v205
    %v236 = vpack.c.b16 %v208, %v207
    %v237 = vpack.c.b16 %v210, %v209
    %v238 = vpack.c.b16 %v212, %v211
    %v239 = vpack.c.b16 %v214, %v213
    %v240 = vpack.c.b16 %v216, %v215
    %v241 = vpack.c.b16 %v218, %v217
    %v242 = vpack.c.b16 %v220, %v219
    %v243 = vpack.c.b16 %v222, %v221
    %v244 = vpack.c.b16 %v224, %v223
    %v245 = vpack.c.b16 %v226, %v225
    %v246 = vpack.c.b16 %v228, %v227
    %v247 = vpack.c.b16 %v230, %v229
    %v248 = vpack.c.b16 %v232, %v231
    %265 = vmatpush.bf16.msra.mxu0 %v240
    %266 = vmatpush.bf16.msra.mxu0 %v239
    %267 = vmatpush.bf16.msra.mxu0 %v238
    %268 = vmatpush.bf16.msra.mxu0 %v237
    %269 = vmatpush.bf16.msra.mxu0 %v236
    %270 = vmatpush.bf16.msra.mxu0 %v235
    %271 = vmatpush.bf16.msra.mxu0 %v234
    %272 = vmatpush.bf16.msra.mxu0 %v233
    %273 = vmatmul.bf16.gmra.mxu0 %v131
    %v274 = vpop.f32.mrf.mxu0
    %v275 = vadd.f32 %v167, %v274
    %v276 = vpop.f32.mrf.mxu0
    %277 = vdwg.mxu0
    %278 = vmatpush.bf16.msra.mxu0 %v248
    %279 = vmatpush.bf16.msra.mxu0 %v247
    %280 = vmatpush.bf16.msra.mxu0 %v246
    %281 = vmatpush.bf16.msra.mxu0 %v245
    %282 = vmatpush.bf16.msra.mxu0 %v244
    %283 = vmatpush.bf16.msra.mxu0 %v243
    %284 = vmatpush.bf16.msra.mxu0 %v242
    %285 = vmatpush.bf16.msra.mxu0 %v241
    %286 = vmatmul.bf16.gmra.mxu0 %v132
    %v287 = vpop.f32.mrf.mxu0
    %v288 = vadd.f32 %v275, %v287
    %v289 = vpop.f32.mrf.mxu0
    %290 = vdwg.mxu0
    %v291 = vmax.f32 %v288, 0.0
    %v292 = vpack.c.bf16 %v291, %v291
    %v293 = vld [vmem:[#allocation8] sm:$0xf]
    %v294 = vld [vmem:[#allocation8 + $0x4] sm:$0xf]
    %v295 = vld [vmem:[#allocation8 + $0x8] sm:$0xf]
    %v296 = vld [vmem:[#allocation8 + $0xc] sm:$0xf]
    %v297 = vld [vmem:[#allocation8 + $0x10] sm:$0xf]
    %v298 = vld [vmem:[#allocation8 + $0x14] sm:$0xf]
    %v299 = vld [vmem:[#allocation8 + $0x18] sm:$0xf]
    %v300 = vld [vmem:[#allocation8 + $0x1c] sm:$0xf]
    %v301 = vld [vmem:[#allocation8 + $0x20] sm:$0xf]
    %v302 = vld [vmem:[#allocation8 + $0x24] sm:$0xf]
    %v303 = vld [vmem:[#allocation8 + $0x28] sm:$0xf]
    %v304 = vld [vmem:[#allocation8 + $0x2c] sm:$0xf]
    %v305 = vld [vmem:[#allocation8 + $0x30] sm:$0xf]
    %v306 = vld [vmem:[#allocation8 + $0x34] sm:$0xf]
    %v307 = vld [vmem:[#allocation8 + $0x38] sm:$0xf]
    %v308 = vld [vmem:[#allocation8 + $0x3c] sm:$0xf]
    %v309 = vld [vmem:[%s5] sm:$0x1]
    %v311 = vperm.slane %v309, 0
    %v329 = vunpack.c.l.b16 %v293
    %v330 = vunpack.c.l.b16 %v294
    %v331 = vunpack.c.l.b16 %v295
    %v332 = vunpack.c.l.b16 %v296
    %v333 = vunpack.c.l.b16 %v297
    %v334 = vunpack.c.l.b16 %v298
    %v335 = vunpack.c.l.b16 %v299
    %v336 = vunpack.c.l.b16 %v300
    %v337 = vunpack.c.l.b16 %v301
    %v338 = vunpack.c.l.b16 %v302
    %v339 = vunpack.c.l.b16 %v303
    %v340 = vunpack.c.l.b16 %v304
    %v341 = vunpack.c.l.b16 %v305
    %v342 = vunpack.c.l.b16 %v306
    %v343 = vunpack.c.l.b16 %v307
    %v344 = vunpack.c.l.b16 %v308
    %v345 = vpack.c.b16 %v330, %v329
    %v346 = vpack.c.b16 %v332, %v331
    %v347 = vpack.c.b16 %v334, %v333
    %v348 = vpack.c.b16 %v336, %v335
    %v349 = vpack.c.b16 %v338, %v337
    %v350 = vpack.c.b16 %v340, %v339
    %v351 = vpack.c.b16 %v342, %v341
    %v352 = vpack.c.b16 %v344, %v343
    %361 = vmatpush.bf16.msra.mxu0 %v352
    %362 = vmatpush.bf16.msra.mxu0 %v351
    %363 = vmatpush.bf16.msra.mxu0 %v350
    %364 = vmatpush.bf16.msra.mxu0 %v349
    %365 = vmatpush.bf16.msra.mxu0 %v348
    %366 = vmatpush.bf16.msra.mxu0 %v347
    %367 = vmatpush.bf16.msra.mxu0 %v346
    %368 = vmatpush.bf16.msra.mxu0 %v345
    %369 = vmatmul.bf16.gmra.mxu0 %v292
    %v370 = vpop.f32.mrf.mxu0
    %v371 = vadd.f32 %v311, %v370
    %v372 = vpop.f32.mrf.mxu0
    %373 = vdwg.mxu0
    %374 = vst [vmem:[#allocation14] sm:$0xff] %v371
    %v375 = vlaneseq
    %v376 = vand.u32 %v375, 127
    %v377 = vmul.f32 %v371, 0.5
    %v378 = vmul.f32 %v377, 1.442695
    %v379 = vpow.pop %v378
    %v380 = vld [vmem:[#allocation5] sm:$0xff]
    %v381 = vmul.f32 %v379, %v380
    %vm382 = vcmp.lt.s32.totalorder %v376, 64
    %v383 = vsel %vm382, %v371, %v381
    %v384 = vpack.c.bf16 %v383, %v383
    %v385 = vld [vmem:[#allocation10] sm:$0xf]
    %v386 = vld [vmem:[#allocation10 + $0x4] sm:$0xf]
    %v387 = vld [vmem:[#allocation10 + $0x8] sm:$0xf]
    %v388 = vld [vmem:[#allocation10 + $0xc] sm:$0xf]
    %v389 = vld [vmem:[#allocation10 + $0x10] sm:$0xf]
    %v390 = vld [vmem:[#allocation10 + $0x14] sm:$0xf]
    %v391 = vld [vmem:[#allocation10 + $0x18] sm:$0xf]
    %v392 = vld [vmem:[#allocation10 + $0x1c] sm:$0xf]
    %v393 = vld [vmem:[#allocation10 + $0x20] sm:$0xf]
    %v394 = vld [vmem:[#allocation10 + $0x24] sm:$0xf]
    %v395 = vld [vmem:[#allocation10 + $0x28] sm:$0xf]
    %v396 = vld [vmem:[#allocation10 + $0x2c] sm:$0xf]
    %v397 = vld [vmem:[#allocation10 + $0x30] sm:$0xf]
    %v398 = vld [vmem:[#allocation10 + $0x34] sm:$0xf]
    %v399 = vld [vmem:[#allocation10 + $0x38] sm:$0xf]
    %v400 = vld [vmem:[#allocation10 + $0x3c] sm:$0xf]
    %v401 = vld [vmem:[%s7] sm:$0x1]
    %v403 = vperm.slane %v401, 0
    %v421 = vunpack.c.l.b16 %v385
    %v422 = vunpack.c.l.b16 %v386
    %v423 = vunpack.c.l.b16 %v387
    %v424 = vunpack.c.l.b16 %v388
    %v425 = vunpack.c.l.b16 %v389
    %v426 = vunpack.c.l.b16 %v390
    %v427 = vunpack.c.l.b16 %v391
    %v428 = vunpack.c.l.b16 %v392
    %v429 = vunpack.c.l.b16 %v393
    %v430 = vunpack.c.l.b16 %v394
    %v431 = vunpack.c.l.b16 %v395
    %v432 = vunpack.c.l.b16 %v396
    %v433 = vunpack.c.l.b16 %v397
    %v434 = vunpack.c.l.b16 %v398
    %v435 = vunpack.c.l.b16 %v399
    %v436 = vunpack.c.l.b16 %v400
    %v437 = vpack.c.b16 %v422, %v421
    %v438 = vpack.c.b16 %v424, %v423
    %v439 = vpack.c.b16 %v426, %v425
    %v440 = vpack.c.b16 %v428, %v427
    %v441 = vpack.c.b16 %v430, %v429
    %v442 = vpack.c.b16 %v432, %v431
    %v443 = vpack.c.b16 %v434, %v433
    %v444 = vpack.c.b16 %v436, %v435
    %453 = vmatpush.bf16.msra.mxu0 %v444
    %454 = vmatpush.bf16.msra.mxu0 %v443
    %455 = vmatpush.bf16.msra.mxu0 %v442
    %456 = vmatpush.bf16.msra.mxu0 %v441
    %457 = vmatpush.bf16.msra.mxu0 %v440
    %458 = vmatpush.bf16.msra.mxu0 %v439
    %459 = vmatpush.bf16.msra.mxu0 %v438
    %460 = vmatpush.bf16.msra.mxu0 %v437
    %461 = vmatmul.bf16.gmra.mxu0 %v384
    %v462 = vpop.f32.mrf.mxu0
    %v463 = vadd.f32 %v403, %v462
    %v464 = vpop.f32.mrf.mxu0
    %465 = vdwg.mxu0
    %v466 = vmax.f32 %v463, 0.0
    %v467 = vpack.c.bf16 %v466, %v466
    %v468 = vld [vmem:[#allocation11] sm:$0xff]
    %v469 = vld [vmem:[#allocation11 + $0x8] sm:$0xff]
    %v470 = vld [vmem:[#allocation11 + $0x10] sm:$0xff]
    %v471 = vld [vmem:[#allocation11 + $0x18] sm:$0xff]
    %v472 = vld [vmem:[#allocation11 + $0x20] sm:$0xff]
    %v473 = vld [vmem:[#allocation11 + $0x28] sm:$0xff]
    %v474 = vld [vmem:[#allocation11 + $0x30] sm:$0xff]
    %v475 = vld [vmem:[#allocation11 + $0x38] sm:$0xff]
    %v476 = vld [vmem:[#allocation11 + $0x40] sm:$0xff]
    %v477 = vld [vmem:[#allocation11 + $0x48] sm:$0xff]
    %v478 = vld [vmem:[#allocation11 + $0x50] sm:$0xff]
    %v479 = vld [vmem:[#allocation11 + $0x58] sm:$0xff]
    %v480 = vld [vmem:[#allocation11 + $0x60] sm:$0xff]
    %v481 = vld [vmem:[#allocation11 + $0x68] sm:$0xff]
    %v482 = vld [vmem:[#allocation11 + $0x70] sm:$0xff]
    %v483 = vld [vmem:[#allocation11 + $0x78] sm:$0xff]
    %v484 = vld [vmem:[%s9] sm:$0x3]
    %v486 = vperm.slane %v484, 0
    %v487 = vperm.slane %v484, 1
    %v506 = vunpack.c.l.b16 %v468
    %v507 = vunpack.c.h.b16 %v468
    %v508 = vunpack.c.l.b16 %v469
    %v509 = vunpack.c.h.b16 %v469
    %v510 = vunpack.c.l.b16 %v470
    %v511 = vunpack.c.h.b16 %v470
    %v512 = vunpack.c.l.b16 %v471
    %v513 = vunpack.c.h.b16 %v471
    %v514 = vunpack.c.l.b16 %v472
    %v515 = vunpack.c.h.b16 %v472
    %v516 = vunpack.c.l.b16 %v473
    %v517 = vunpack.c.h.b16 %v473
    %v518 = vunpack.c.l.b16 %v474
    %v519 = vunpack.c.h.b16 %v474
    %v520 = vunpack.c.l.b16 %v475
    %v521 = vunpack.c.h.b16 %v475
    %v522 = vunpack.c.l.b16 %v476
    %v523 = vunpack.c.h.b16 %v476
    %v524 = vunpack.c.l.b16 %v477
    %v525 = vunpack.c.h.b16 %v477
    %v526 = vunpack.c.l.b16 %v478
    %v527 = vunpack.c.h.b16 %v478
    %v528 = vunpack.c.l.b16 %v479
    %v529 = vunpack.c.h.b16 %v479
    %v530 = vunpack.c.l.b16 %v480
    %v531 = vunpack.c.h.b16 %v480
    %v532 = vunpack.c.l.b16 %v481
    %v533 = vunpack.c.h.b16 %v481
    %v534 = vunpack.c.l.b16 %v482
    %v535 = vunpack.c.h.b16 %v482
    %v536 = vunpack.c.l.b16 %v483
    %v537 = vunpack.c.h.b16 %v483
    %v538 = vpack.c.b16 %v508, %v506
    %v539 = vpack.c.b16 %v509, %v507
    %v540 = vpack.c.b16 %v512, %v510
    %v541 = vpack.c.b16 %v513, %v511
    %v542 = vpack.c.b16 %v516, %v514
    %v543 = vpack.c.b16 %v517, %v515
    %v544 = vpack.c.b16 %v520, %v518
    %v545 = vpack.c.b16 %v521, %v519
    %v546 = vpack.c.b16 %v524, %v522
    %v547 = vpack.c.b16 %v525, %v523
    %v548 = vpack.c.b16 %v528, %v526
    %v549 = vpack.c.b16 %v529, %v527
    %v550 = vpack.c.b16 %v532, %v530
    %v551 = vpack.c.b16 %v533, %v531
    %v552 = vpack.c.b16 %v536, %v534
    %v553 = vpack.c.b16 %v537, %v535
    %570 = vmatpush.bf16.msra.mxu0 %v552
    %571 = vmatpush.bf16.msra.mxu0 %v550
    %572 = vmatpush.bf16.msra.mxu0 %v548
    %573 = vmatpush.bf16.msra.mxu0 %v546
    %574 = vmatpush.bf16.msra.mxu0 %v544
    %575 = vmatpush.bf16.msra.mxu0 %v542
    %576 = vmatpush.bf16.msra.mxu0 %v540
    %577 = vmatpush.bf16.msra.mxu0 %v538
    %578 = vmatmul.bf16.gmra.mxu0 %v467
    %v579 = vpop.f32.mrf.mxu0
    %v580 = vadd.f32 %v486, %v579
    %v581 = vpop.f32.mrf.mxu0
    %582 = vdwg.mxu0
    %583 = vmatpush.bf16.msra.mxu0 %v553
    %584 = vmatpush.bf16.msra.mxu0 %v551
    %585 = vmatpush.bf16.msra.mxu0 %v549
    %586 = vmatpush.bf16.msra.mxu0 %v547
    %587 = vmatpush.bf16.msra.mxu0 %v545
    %588 = vmatpush.bf16.msra.mxu0 %v543
    %589 = vmatpush.bf16.msra.mxu0 %v541
    %590 = vmatpush.bf16.msra.mxu0 %v539
    %591 = vmatmul.bf16.gmra.mxu0 %v467
    %v592 = vpop.f32.mrf.mxu0
    %v593 = vadd.f32 %v487, %v592
    %v594 = vpop.f32.mrf.mxu0
    %595 = vdwg.mxu0
    %v596 = vxor.u32 %v580, 2147483648
    %v597 = vxor.u32 %v593, 2147483648
    %v598 = vmul.f32 %v596, 1.442695
    %v599 = vpow.pop %v598
    %v600 = vmul.f32 %v597, 1.442695
    %v601 = vpow.pop %v600
    %v602 = vadd.f32 %v599, 1.0
    %v603 = vadd.f32 %v601, 1.0
    %v604 = vrcp.pop %v602
    %v605 = vmul.f32 %v602, %v604
    %v606 = vsub.f32 1.0, %v605
    %v607 = vmul.f32 %v604, %v606
    %v608 = vadd.f32 %v604, %v607
    %vm609 = vweird.f32 %v602
    %vm610 = vweird.f32 %v604
    %vm611 = vmor %vm609, %vm610
    %v612 = vsel %vm611, %v604, %v608
    %v613 = vand.u32 2147483647, %v602
    %vm614 = vcmp.eq.f32.partialorder %v613, 8.507059e+37
    %v615 = vand.u32 %v602, 2147483648
    %v616 = vor.u32 1.1754944e-38, %v615
    %v617 = vsel %vm614, %v616, %v612
    %v618 = vmul.f32 1.0, %v617
    %v619 = vrcp.pop %v603
    %v620 = vmul.f32 %v603, %v619
    %v621 = vsub.f32 1.0, %v620
    %v622 = vmul.f32 %v619, %v621
    %v623 = vadd.f32 %v619, %v622
    %vm624 = vweird.f32 %v603
    %vm625 = vweird.f32 %v619
    %vm626 = vmor %vm624, %vm625
    %v627 = vsel %vm626, %v619, %v623
    %v628 = vand.u32 2147483647, %v603
    %vm629 = vcmp.eq.f32.partialorder %v628, 8.507059e+37
    %v630 = vand.u32 %v603, 2147483648
    %v631 = vor.u32 1.1754944e-38, %v630
    %v632 = vsel %vm629, %v631, %v627
    %v633 = vmul.f32 1.0, %v632
    %634 = vst [vmem:[#allocation13] sm:$0xff] %v618
    %635 = vst [vmem:[#allocation13 + $0x8] sm:$0xff] %v633
    // Predicated region
    $region66: #{tpu_custom_call.1} parent=1 // pred_check
      _
    $region67: #{tpu_custom_call.1} parent=1 // pred_check_branch
      %637 = sbr.rel (0) target = $region69
    $region68: #{tpu_custom_call.1} parent=1 // pred_region
      %639 = vsyncadd [#allocation4], 0
      %s641 = sshll.u32 [#allocation13], 4
      %s642 = int_to_ptr.vmem [resolvable:$true] %s641
      %s643 = sshll.u32 %s10, 4
      %s644 = int_to_ptr.hbm [resolvable:$true] %s643
      %646 = dma.vmem_to_hbm [thread:$0]  %s642, 256, %s644, [#allocation4]
    $region69: #{tpu_custom_call.1} parent=1 // pred_fallthru
      _
    // Predicated region
    $region70: #{tpu_custom_call.1} parent=1 // pred_check
      _
    $region71: #{tpu_custom_call.1} parent=1 // pred_check_branch
      %648 = sbr.rel (0) target = $region73
    $region72: #{tpu_custom_call.1} parent=1 // pred_region
      %650 = vsyncadd [#allocation15], 0
      %s652 = sshll.u32 [#allocation14], 4
      %s653 = int_to_ptr.vmem [resolvable:$true] %s652
      %s654 = sshll.u32 %s11, 4
      %s655 = int_to_ptr.hbm [resolvable:$true] %s654
      %657 = dma.vmem_to_hbm [thread:$0]  %s653, 128, %s655, [#allocation15]
    $region73: #{tpu_custom_call.1} parent=1 // pred_fallthru
      _
    // Predicated region
    $region74: #{tpu_custom_call.1} parent=1 // pred_check
      _
    $region75: #{tpu_custom_call.1} parent=1 // pred_check_branch
      %659 = sbr.rel (0) target = $region77
    $region76: #{tpu_custom_call.1} parent=1 // pred_region
      %661 = dma.done [#allocation4], 256
    $region77: #{tpu_custom_call.1} parent=1 // pred_fallthru
      _
    // Predicated region
    $region78: #{tpu_custom_call.1} parent=1 // pred_check
      _
    $region79: #{tpu_custom_call.1} parent=1 // pred_check_branch
      %663 = sbr.rel (0) target = $region81
    $region80: #{tpu_custom_call.1} parent=1 // pred_region
      %665 = dma.done [#allocation15], 128
    $region81: #{tpu_custom_call.1} parent=1 // pred_fallthru
      _
    %666 = vsyncpa [#allocation3], 1
    %667 = vsyncpa [#allocation6], 1
    %668 = vsyncpa [#allocation9], 1
    %669 = vsyncpa [#allocation12], 1
    %670 = vsyncpa [#allocation4], 1
    %671 = vsyncpa [#allocation15], 1

</llo_original>
